<compile_context>
chip_gen: v7x
topology: tpu7x:2x2x1
jax: 0.10.0
libtpu: 0.0.40
codegen_flags: <defaults>
</compile_context>

<pallas_src>
import functools

import jax
import jax.numpy as jnp
from jax.experimental import pallas as pl
from jax.experimental.pallas import tpu as pltpu


# ----------------------------------------------------------------------------
# Kernel
# ----------------------------------------------------------------------------
def _make_kernel(n_linear: int, d: int):
    """Fused s/t-net kernel with `n_linear` Linear layers per net.

    Ref order: u(D,TILE_B), mask(D,1), W_0..W_{L-1}, b_0..b_{L-1}, x, logdet.
    Layer 0 fused weight is (2H, D) (both nets share mu); deeper layers are
    block-diagonal (2*out, 2*in); the final layer emits (2D, TILE_B) = [s ; t].
    """

    def kernel(*refs):
        u_ref = refs[0]                                   # (D, TILE_B) f32
        mask_ref = refs[1]                                # (D, 1)      f32
        w_refs = refs[2: 2 + n_linear]                    # fused weights (bf16 or f32)
        b_refs = refs[2 + n_linear: 2 + 2 * n_linear]     # fused biases  (out, 1) f32
        x_ref = refs[2 + 2 * n_linear]
        ld_ref = refs[2 + 2 * n_linear + 1]

        u = u_ref[...]
        mask = mask_ref[...]                              # broadcasts over batch lanes
        inv_mask = 1.0 - mask
        mu = u * mask

        dot_dtype = w_refs[0].dtype                       # bf16 (default) or f32
        h = mu
        for i in range(n_linear):
            w = w_refs[i][...]
            b = b_refs[i][...]
            z = jnp.dot(w, h.astype(dot_dtype),
                        preferred_element_type=jnp.float32) + b
            if i < n_linear - 1:
                # Rows [0, half) are the s-net (tanh), rows [half, 2*half) the
                # t-net (relu).  half == hidden_size is a multiple of 8, so these
                # are sublane-aligned static slices (no layout copies) and tanh
                # runs only on the rows that need it (EUP work halved vs. a
                # full-block tanh + where select; no per-layer iota temporaries).
                half = z.shape[0] // 2
                h = jnp.concatenate(
                    [jnp.tanh(z[:half, :]), jnp.maximum(z[half:, :], 0.0)],
                    axis=0)
            else:
                h = z

        # Final fused-layer rows: [0, d) = s_raw, [d, 2d) = t_raw.
        s = h[:d, :] * inv_mask
        t = h[d:, :] * inv_mask
        # mask is binary -> inv_mask is idempotent; s and t already carry it.
        x_ref[...] = mu + inv_mask * (u * jnp.exp(s)) + t
        ld_ref[...] = s

    return kernel


# ----------------------------------------------------------------------------
# Wrapper helpers
# ----------------------------------------------------------------------------
def _round_up(x: int, m: int) -> int:
    return ((x + m - 1) // m) * m


def _choose_tile_b(batch: int, max_tile_b: int):
    """Pick (tile_b, padded_batch) for the lane/batch axis.

    * lane-granular (128): avoids padding waste for e.g. B=384 (v5e note);
    * large batches: max_tile_b-wide tiles (default 4096) amortize per-step
      overhead and MXU weight loads while keeping the per-tile f32 working set
      (~a few MiB) far below v7x's 64 MiB VMEM;
    * medium batches: split into exactly two tiles (no extra padding) so the
      "parallel" grid axis can shard over both v7x TensorCores.
    """
    b128 = _round_up(max(batch, 1), 128)
    if b128 > max_tile_b:
        return max_tile_b, _round_up(b128, max_tile_b)
    if b128 >= 1024 and b128 % 256 == 0:
        return b128 // 2, b128
    return b128, b128


def _fuse_params(s_params, t_params, matmul_dtype):
    """Fuse s/t net params for the (features, batch) layout.

    Inputs: lists (W0, b0, W1, b1, ...) with W stored (in, out), b (1, out).
    Output: per-layer fused W (out', in') in `matmul_dtype` (layer 0 row-concat,
    deeper layers block-diagonal) and fused b (out', 1) kept in f32.
    """
    n_linear = len(s_params) // 2
    ws, bs = [], []
    for i in range(n_linear):
        ws_i = s_params[2 * i].T                 # (out, in)
        wt_i = t_params[2 * i].T
        bs_i = s_params[2 * i + 1].T             # (out, 1)
        bt_i = t_params[2 * i + 1].T
        if i == 0:
            w = jnp.concatenate([ws_i, wt_i], axis=0)                 # (2*out, in)
        else:
            zs = jnp.zeros((ws_i.shape[0], wt_i.shape[1]), ws_i.dtype)
            zt = jnp.zeros((wt_i.shape[0], ws_i.shape[1]), wt_i.dtype)
            w = jnp.concatenate(
                [jnp.concatenate([ws_i, zs], axis=1),
                 jnp.concatenate([zt, wt_i], axis=1)],
                axis=0)                                               # (2*out, 2*in)
        b = jnp.concatenate([bs_i, bt_i], axis=0)                     # (2*out, 1)
        ws.append(w.astype(matmul_dtype))
        bs.append(b.astype(jnp.float32))
    return ws, bs


# ----------------------------------------------------------------------------
# Entry points
# ----------------------------------------------------------------------------
@functools.partial(jax.jit, static_argnames=("matmul_dtype", "max_tile_b"))
def linear_masked_coupling_forward_fmajor(u_t, mask, s_params, t_params, *,
                                          matmul_dtype=jnp.bfloat16,
                                          max_tile_b=4096):
    """Forward in feature-major layout.

    u_t: (D, B).  Returns (x_t, logdet_t), both (D, B).  Keeping the (D, B)
    layout end-to-end lets stacked coupling layers compose without per-layer
    HBM transpose passes (transpose once outside the whole flow).
    """
    assert len(s_params) == len(t_params) and len(s_params) % 2 == 0
    n_linear = len(s_params) // 2
    D, B = u_t.shape

    ws, bs = _fuse_params(s_params, t_params, matmul_dtype)

    tile_b, b_pad = _choose_tile_b(B, max_tile_b)
    if b_pad != B:   # only when B is not 128/tile aligned; otherwise no pad pass
        u_t = jnp.pad(u_t, ((0, 0), (0, b_pad - B)))
    mask_col = jnp.reshape(mask, (D, 1)).astype(u_t.dtype)

    steps = b_pad // tile_b
    kernel = _make_kernel(n_linear, D)

    tile_spec = pl.BlockSpec((D, tile_b), lambda i: (0, i))
    resident = lambda a: pl.BlockSpec(tuple(a.shape), lambda i: (0, 0))

    in_specs = [tile_spec, resident(mask_col)]
    in_specs += [resident(w) for w in ws]
    in_specs += [resident(b) for b in bs]

    # Advisory cost estimate so XLA schedules surrounding ops sensibly.
    flops = 2 * b_pad * sum(w.shape[0] * w.shape[1] for w in ws)
    transcendentals = b_pad * (sum(w.shape[0] // 2 for w in ws[:-1]) + D)
    bytes_accessed = (4 * 3 * b_pad * D
                      + sum(w.size * w.dtype.itemsize for w in ws)
                      + sum(b.size * b.dtype.itemsize for b in bs))

    x_t, ld_t = pl.pallas_call(
        kernel,
        grid=(steps,),
        in_specs=in_specs,
        out_specs=(tile_spec, tile_spec),
        out_shape=(jax.ShapeDtypeStruct((D, b_pad), u_t.dtype),
                   jax.ShapeDtypeStruct((D, b_pad), u_t.dtype)),
        compiler_params=pltpu.CompilerParams(
            dimension_semantics=("parallel",)),
        cost_estimate=pl.CostEstimate(
            flops=int(flops),
            transcendentals=int(transcendentals),
            bytes_accessed=int(bytes_accessed)),
    )(u_t, mask_col, *ws, *bs)

    if b_pad != B:
        x_t = x_t[:, :B]
        ld_t = ld_t[:, :B]
    return x_t, ld_t


@functools.partial(jax.jit, static_argnames=("matmul_dtype", "max_tile_b"))
def linear_masked_coupling_forward(u, mask, s_params, t_params, *,
                                   matmul_dtype=jnp.bfloat16, max_tile_b=4096):
    """PyTorch-layout entry point: u is (B, D); returns (x, log_abs_det_jacobian).

    The two transposes here are one HBM pass each over the D*B activations; when
    composing many coupling layers, use the *_fmajor entry point and keep the
    (D, B) layout across the whole flow instead.
    """
    x_t, ld_t = linear_masked_coupling_forward_fmajor(
        jnp.transpose(u), mask, s_params, t_params,
        matmul_dtype=matmul_dtype, max_tile_b=max_tile_b)
    return jnp.transpose(x_t), jnp.transpose(ld_t)


# ----------------------------------------------------------------------------
# Parameter construction + pure-JAX reference (PyTorch semantics)
# ----------------------------------------------------------------------------
def _init_linear(key, fan_in, fan_out):
    """Deterministic init mimicking PyTorch nn.Linear defaults (uniform +/- 1/sqrt(fan_in))."""
    kw, kb = jax.random.split(key)
    bound = 1.0 / (fan_in ** 0.5)
    w = jax.random.uniform(kw, (fan_in, fan_out), jnp.float32, -bound, bound)
    b = jax.random.uniform(kb, (1, fan_out), jnp.float32, -bound, bound)
    return w, b


def build_params(key, input_size, hidden_size, n_hidden):
    """Build s_net and t_net parameter lists: n_hidden + 2 Linear layers each."""
    dims = [input_size] + [hidden_size] * (n_hidden + 1) + [input_size]
    n_linear = len(dims) - 1
    keys = jax.random.split(key, 2 * n_linear)
    s_params, t_params = [], []
    for i in range(n_linear):
        w, b = _init_linear(keys[i], dims[i], dims[i + 1])
        s_params += [w, b]
    for i in range(n_linear):
        w, b = _init_linear(keys[n_linear + i], dims[i], dims[i + 1])
        t_params += [w, b]
    return s_params, t_params


def reference_forward(u, mask, s_params, t_params, matmul_dtype=jnp.float32):
    """Pure-JAX reference matching the PyTorch module semantics.

    With matmul_dtype=jnp.bfloat16 it mirrors the kernel's bf16-matmul /
    f32-accumulate numerics exactly (same dot products, same accumulation dtype).
    """
    n_linear = len(s_params) // 2
    inv_mask = 1.0 - mask
    mu = u * mask

    def run_net(params, act):
        h = mu
        for i in range(n_linear):
            w = params[2 * i].astype(matmul_dtype)
            b = params[2 * i + 1]
            h = jnp.dot(h.astype(matmul_dtype), w,
                        preferred_element_type=jnp.float32) + b
            if i < n_linear - 1:
                h = act(h)
        return h

    s = run_net(s_params, jnp.tanh) * inv_mask
    t = run_net(t_params, lambda z: jnp.maximum(z, 0.0)) * inv_mask
    x = mu + inv_mask * (u * jnp.exp(s) + t)
    logdet = inv_mask * s
    return x, logdet


if __name__ == "__main__":
    batch = 384          # multiple of 128 (not 256): exercises the pad-free lane-granular tile
    input_size = 8
    hidden_size = 32
    n_hidden = 2

    key = jax.random.PRNGKey(0)
    k_u, k_params = jax.random.split(key)

    u = jax.random.normal(k_u, (batch, input_size), jnp.float32)
    # Alternating binary mask (typical RealNVP/MAF coupling mask), shape (1, D).
    mask = (jnp.arange(input_size) % 2).astype(jnp.float32).reshape(1, input_size)

    s_params, t_params = build_params(k_params, input_size, hidden_size, n_hidden)

    # Default (performance) path: bf16 MXU matmuls with f32 accumulation / epilogue.
    x, logdet = linear_masked_coupling_forward(u, mask, s_params, t_params)
    jax.block_until_ready((x, logdet))

    # Tight check against a pure-JAX reference that uses the SAME bf16-matmul numerics
    # (isolates algorithmic correctness from the precision choice).
    x_mp, ld_mp = reference_forward(u, mask, s_params, t_params, matmul_dtype=jnp.bfloat16)
    assert jnp.allclose(x, x_mp, atol=5e-3, rtol=5e-3), float(jnp.max(jnp.abs(x - x_mp)))
    assert jnp.allclose(logdet, ld_mp, atol=5e-3, rtol=5e-3), float(
        jnp.max(jnp.abs(logdet - ld_mp)))

    # Loose sanity bracket against the full-f32 PyTorch-semantics reference
    # (the only difference is bf16 matmul rounding).
    x_f32, ld_f32 = reference_forward(u, mask, s_params, t_params, matmul_dtype=jnp.float32)
    assert jnp.allclose(x, x_f32, atol=1e-1, rtol=1e-1), float(jnp.max(jnp.abs(x - x_f32)))
    assert jnp.allclose(logdet, ld_f32, atol=1e-1, rtol=1e-1), float(
        jnp.max(jnp.abs(logdet - ld_f32)))

    # f32-matmul variant of the same kernel matches the f32 reference tightly
    # (demonstrates exactness of the fused-kernel algorithm itself).
    x32, ld32 = linear_masked_coupling_forward(u, mask, s_params, t_params,
                                               matmul_dtype=jnp.float32)
    jax.block_until_ready((x32, ld32))
    assert jnp.allclose(x32, x_f32, atol=1e-4, rtol=1e-4), float(jnp.max(jnp.abs(x32 - x_f32)))
    assert jnp.allclose(ld32, ld_f32, atol=1e-4, rtol=1e-4), float(
        jnp.max(jnp.abs(ld32 - ld_f32)))

    print("KERNEL_OK")
</pallas_src>

<mosaic_0001>
module attributes {stable_mosaic.version = 11 : i64} {
  func.func @kernel(%arg0: i32, %arg1: memref<8x384xf32, #tpu.memory_space<vmem>>, %arg2: memref<8x1xf32, #tpu.memory_space<vmem>>, %arg3: memref<64x8xbf16, #tpu.memory_space<vmem>>, %arg4: memref<64x64xbf16, #tpu.memory_space<vmem>>, %arg5: memref<64x64xbf16, #tpu.memory_space<vmem>>, %arg6: memref<16x64xbf16, #tpu.memory_space<vmem>>, %arg7: memref<64x1xf32, #tpu.memory_space<vmem>>, %arg8: memref<64x1xf32, #tpu.memory_space<vmem>>, %arg9: memref<64x1xf32, #tpu.memory_space<vmem>>, %arg10: memref<16x1xf32, #tpu.memory_space<vmem>>, %arg11: memref<8x384xf32, #tpu.memory_space<vmem>>, %arg12: memref<8x384xf32, #tpu.memory_space<vmem>>) attributes {dimension_semantics = [#tpu.dimension_semantics<parallel>], iteration_bounds = array<i64: 1>, scalar_prefetch = 0 : i64, scratch_operands = 0 : i64, tpu.core_type = #tpu.core_type<tc>, window_params = [{transform_indices = @transform_0, window_bounds = array<i64: 8, 384>}, {pipeline_mode = #tpu.pipeline_mode<synchronous>, transform_indices = @transform_1, window_bounds = array<i64: 8, 1>}, {pipeline_mode = #tpu.pipeline_mode<synchronous>, transform_indices = @transform_2, window_bounds = array<i64: 64, 8>}, {pipeline_mode = #tpu.pipeline_mode<synchronous>, transform_indices = @transform_3, window_bounds = array<i64: 64, 64>}, {pipeline_mode = #tpu.pipeline_mode<synchronous>, transform_indices = @transform_4, window_bounds = array<i64: 64, 64>}, {pipeline_mode = #tpu.pipeline_mode<synchronous>, transform_indices = @transform_5, window_bounds = array<i64: 16, 64>}, {pipeline_mode = #tpu.pipeline_mode<synchronous>, transform_indices = @transform_6, window_bounds = array<i64: 64, 1>}, {pipeline_mode = #tpu.pipeline_mode<synchronous>, transform_indices = @transform_7, window_bounds = array<i64: 64, 1>}, {pipeline_mode = #tpu.pipeline_mode<synchronous>, transform_indices = @transform_8, window_bounds = array<i64: 64, 1>}, {pipeline_mode = #tpu.pipeline_mode<synchronous>, transform_indices = @transform_9, window_bounds = array<i64: 16, 1>}, {transform_indices = @transform_10, window_bounds = array<i64: 8, 384>}, {transform_indices = @transform_11, window_bounds = array<i64: 8, 384>}]} {
    %c0 = arith.constant 0 : index
    %c0_0 = arith.constant 0 : index
    %0 = vector.load %arg1[%c0, %c0_0] : memref<8x384xf32, #tpu.memory_space<vmem>>, vector<8x384xf32>
    %c0_1 = arith.constant 0 : index
    %c0_2 = arith.constant 0 : index
    %1 = vector.load %arg2[%c0_1, %c0_2] : memref<8x1xf32, #tpu.memory_space<vmem>>, vector<8x1xf32>
    %cst = arith.constant 1.000000e+00 : f32
    %2 = vector.broadcast %cst : f32 to vector<8x1xf32>
    %3 = arith.subf %2, %1 : vector<8x1xf32>
    %4 = vector.broadcast %1 : vector<8x1xf32> to vector<8x384xf32>
    %5 = arith.mulf %0, %4 : vector<8x384xf32>
    %c0_3 = arith.constant 0 : index
    %c0_4 = arith.constant 0 : index
    %6 = vector.load %arg3[%c0_3, %c0_4] : memref<64x8xbf16, #tpu.memory_space<vmem>>, vector<64x8xbf16>
    %c0_5 = arith.constant 0 : index
    %c0_6 = arith.constant 0 : index
    %7 = vector.load %arg7[%c0_5, %c0_6] : memref<64x1xf32, #tpu.memory_space<vmem>>, vector<64x1xf32>
    %8 = arith.truncf %5 : vector<8x384xf32> to vector<8x384xbf16>
    %cst_7 = arith.constant dense<0.000000e+00> : vector<64x384xf32>
    %9 = tpu.matmul %6, %8, %cst_7 {dimension_numbers = #tpu.dot_dimension_numbers<[1], [0], [0], [1], [0, 0, 1, 1], [], []>} : vector<64x8xbf16>, vector<8x384xbf16>, vector<64x384xf32> -> vector<64x384xf32>
    %10 = vector.broadcast %7 : vector<64x1xf32> to vector<64x384xf32>
    %11 = arith.addf %9, %10 : vector<64x384xf32>
    %12 = vector.extract_strided_slice %11 {offsets = [0, 0], sizes = [32, 384], strides = [1, 1]} : vector<64x384xf32> to vector<32x384xf32>
    %13 = math.tanh %12 : vector<32x384xf32>
    %14 = vector.extract_strided_slice %11 {offsets = [32, 0], sizes = [32, 384], strides = [1, 1]} : vector<64x384xf32> to vector<32x384xf32>
    %cst_8 = arith.constant 0.000000e+00 : f32
    %15 = vector.broadcast %cst_8 : f32 to vector<32x384xf32>
    %16 = arith.maximumf %14, %15 : vector<32x384xf32>
    %17 = tpu.concatenate %13, %16 in 0 : vector<32x384xf32>, vector<32x384xf32> -> vector<64x384xf32>
    %c0_9 = arith.constant 0 : index
    %c0_10 = arith.constant 0 : index
    %18 = vector.load %arg4[%c0_9, %c0_10] : memref<64x64xbf16, #tpu.memory_space<vmem>>, vector<64x64xbf16>
    %c0_11 = arith.constant 0 : index
    %c0_12 = arith.constant 0 : index
    %19 = vector.load %arg8[%c0_11, %c0_12] : memref<64x1xf32, #tpu.memory_space<vmem>>, vector<64x1xf32>
    %20 = arith.truncf %17 : vector<64x384xf32> to vector<64x384xbf16>
    %cst_13 = arith.constant dense<0.000000e+00> : vector<64x384xf32>
    %21 = tpu.matmul %18, %20, %cst_13 {dimension_numbers = #tpu.dot_dimension_numbers<[1], [0], [0], [1], [0, 0, 1, 1], [], []>} : vector<64x64xbf16>, vector<64x384xbf16>, vector<64x384xf32> -> vector<64x384xf32>
    %22 = vector.broadcast %19 : vector<64x1xf32> to vector<64x384xf32>
    %23 = arith.addf %21, %22 : vector<64x384xf32>
    %24 = vector.extract_strided_slice %23 {offsets = [0, 0], sizes = [32, 384], strides = [1, 1]} : vector<64x384xf32> to vector<32x384xf32>
    %25 = math.tanh %24 : vector<32x384xf32>
    %26 = vector.extract_strided_slice %23 {offsets = [32, 0], sizes = [32, 384], strides = [1, 1]} : vector<64x384xf32> to vector<32x384xf32>
    %cst_14 = arith.constant 0.000000e+00 : f32
    %27 = vector.broadcast %cst_14 : f32 to vector<32x384xf32>
    %28 = arith.maximumf %26, %27 : vector<32x384xf32>
    %29 = tpu.concatenate %25, %28 in 0 : vector<32x384xf32>, vector<32x384xf32> -> vector<64x384xf32>
    %c0_15 = arith.constant 0 : index
    %c0_16 = arith.constant 0 : index
    %30 = vector.load %arg5[%c0_15, %c0_16] : memref<64x64xbf16, #tpu.memory_space<vmem>>, vector<64x64xbf16>
    %c0_17 = arith.constant 0 : index
    %c0_18 = arith.constant 0 : index
    %31 = vector.load %arg9[%c0_17, %c0_18] : memref<64x1xf32, #tpu.memory_space<vmem>>, vector<64x1xf32>
    %32 = arith.truncf %29 : vector<64x384xf32> to vector<64x384xbf16>
    %cst_19 = arith.constant dense<0.000000e+00> : vector<64x384xf32>
    %33 = tpu.matmul %30, %32, %cst_19 {dimension_numbers = #tpu.dot_dimension_numbers<[1], [0], [0], [1], [0, 0, 1, 1], [], []>} : vector<64x64xbf16>, vector<64x384xbf16>, vector<64x384xf32> -> vector<64x384xf32>
    %34 = vector.broadcast %31 : vector<64x1xf32> to vector<64x384xf32>
    %35 = arith.addf %33, %34 : vector<64x384xf32>
    %36 = vector.extract_strided_slice %35 {offsets = [0, 0], sizes = [32, 384], strides = [1, 1]} : vector<64x384xf32> to vector<32x384xf32>
    %37 = math.tanh %36 : vector<32x384xf32>
    %38 = vector.extract_strided_slice %35 {offsets = [32, 0], sizes = [32, 384], strides = [1, 1]} : vector<64x384xf32> to vector<32x384xf32>
    %cst_20 = arith.constant 0.000000e+00 : f32
    %39 = vector.broadcast %cst_20 : f32 to vector<32x384xf32>
    %40 = arith.maximumf %38, %39 : vector<32x384xf32>
    %41 = tpu.concatenate %37, %40 in 0 : vector<32x384xf32>, vector<32x384xf32> -> vector<64x384xf32>
    %c0_21 = arith.constant 0 : index
    %c0_22 = arith.constant 0 : index
    %42 = vector.load %arg6[%c0_21, %c0_22] : memref<16x64xbf16, #tpu.memory_space<vmem>>, vector<16x64xbf16>
    %c0_23 = arith.constant 0 : index
    %c0_24 = arith.constant 0 : index
    %43 = vector.load %arg10[%c0_23, %c0_24] : memref<16x1xf32, #tpu.memory_space<vmem>>, vector<16x1xf32>
    %44 = arith.truncf %41 : vector<64x384xf32> to vector<64x384xbf16>
    %cst_25 = arith.constant dense<0.000000e+00> : vector<16x384xf32>
    %45 = tpu.matmul %42, %44, %cst_25 {dimension_numbers = #tpu.dot_dimension_numbers<[1], [0], [0], [1], [0, 0, 1, 1], [], []>} : vector<16x64xbf16>, vector<64x384xbf16>, vector<16x384xf32> -> vector<16x384xf32>
    %46 = vector.broadcast %43 : vector<16x1xf32> to vector<16x384xf32>
    %47 = arith.addf %45, %46 : vector<16x384xf32>
    %48 = vector.extract_strided_slice %47 {offsets = [0, 0], sizes = [8, 384], strides = [1, 1]} : vector<16x384xf32> to vector<8x384xf32>
    %49 = vector.broadcast %3 : vector<8x1xf32> to vector<8x384xf32>
    %50 = arith.mulf %48, %49 : vector<8x384xf32>
    %51 = vector.extract_strided_slice %47 {offsets = [8, 0], sizes = [8, 384], strides = [1, 1]} : vector<16x384xf32> to vector<8x384xf32>
    %52 = vector.broadcast %3 : vector<8x1xf32> to vector<8x384xf32>
    %53 = arith.mulf %51, %52 : vector<8x384xf32>
    %54 = math.exp %50 : vector<8x384xf32>
    %55 = arith.mulf %0, %54 : vector<8x384xf32>
    %56 = vector.broadcast %3 : vector<8x1xf32> to vector<8x384xf32>
    %57 = arith.mulf %56, %55 : vector<8x384xf32>
    %58 = arith.addf %5, %57 : vector<8x384xf32>
    %59 = arith.addf %58, %53 : vector<8x384xf32>
    %c0_26 = arith.constant 0 : index
    %c0_27 = arith.constant 0 : index
    %60 = vector.load %arg11[%c0_26, %c0_27] : memref<8x384xf32, #tpu.memory_space<vmem>>, vector<8x384xf32>
    tpu.vector_store %arg11[%c0_26, %c0_27], %59 {strides = array<i32>} : memref<8x384xf32, #tpu.memory_space<vmem>>, vector<8x384xf32>,
    %c0_28 = arith.constant 0 : index
    %c0_29 = arith.constant 0 : index
    %61 = vector.load %arg12[%c0_28, %c0_29] : memref<8x384xf32, #tpu.memory_space<vmem>>, vector<8x384xf32>
    tpu.vector_store %arg12[%c0_28, %c0_29], %50 {strides = array<i32>} : memref<8x384xf32, #tpu.memory_space<vmem>>, vector<8x384xf32>,
    return
  }
  func.func @transform_0(%arg0: i32) -> (i32, i32) {
    %c0_i32 = arith.constant 0 : i32
    %c0_i32_0 = arith.constant 0 : i32
    return %c0_i32, %arg0 : i32, i32
  }
  func.func @transform_1(%arg0: i32) -> (i32, i32) {
    %c0_i32 = arith.constant 0 : i32
    %c0_i32_0 = arith.constant 0 : i32
    %c0_i32_1 = arith.constant 0 : i32
    return %c0_i32, %c0_i32_0 : i32, i32
  }
  func.func @transform_2(%arg0: i32) -> (i32, i32) {
    %c0_i32 = arith.constant 0 : i32
    %c0_i32_0 = arith.constant 0 : i32
    %c0_i32_1 = arith.constant 0 : i32
    return %c0_i32, %c0_i32_0 : i32, i32
  }
  func.func @transform_3(%arg0: i32) -> (i32, i32) {
    %c0_i32 = arith.constant 0 : i32
    %c0_i32_0 = arith.constant 0 : i32
    %c0_i32_1 = arith.constant 0 : i32
    return %c0_i32, %c0_i32_0 : i32, i32
  }
  func.func @transform_4(%arg0: i32) -> (i32, i32) {
    %c0_i32 = arith.constant 0 : i32
    %c0_i32_0 = arith.constant 0 : i32
    %c0_i32_1 = arith.constant 0 : i32
    return %c0_i32, %c0_i32_0 : i32, i32
  }
  func.func @transform_5(%arg0: i32) -> (i32, i32) {
    %c0_i32 = arith.constant 0 : i32
    %c0_i32_0 = arith.constant 0 : i32
    %c0_i32_1 = arith.constant 0 : i32
    return %c0_i32, %c0_i32_0 : i32, i32
  }
  func.func @transform_6(%arg0: i32) -> (i32, i32) {
    %c0_i32 = arith.constant 0 : i32
    %c0_i32_0 = arith.constant 0 : i32
    %c0_i32_1 = arith.constant 0 : i32
    return %c0_i32, %c0_i32_0 : i32, i32
  }
  func.func @transform_7(%arg0: i32) -> (i32, i32) {
    %c0_i32 = arith.constant 0 : i32
    %c0_i32_0 = arith.constant 0 : i32
    %c0_i32_1 = arith.constant 0 : i32
    return %c0_i32, %c0_i32_0 : i32, i32
  }
  func.func @transform_8(%arg0: i32) -> (i32, i32) {
    %c0_i32 = arith.constant 0 : i32
    %c0_i32_0 = arith.constant 0 : i32
    %c0_i32_1 = arith.constant 0 : i32
    return %c0_i32, %c0_i32_0 : i32, i32
  }
  func.func @transform_9(%arg0: i32) -> (i32, i32) {
    %c0_i32 = arith.constant 0 : i32
    %c0_i32_0 = arith.constant 0 : i32
    %c0_i32_1 = arith.constant 0 : i32
    return %c0_i32, %c0_i32_0 : i32, i32
  }
  func.func @transform_10(%arg0: i32) -> (i32, i32) {
    %c0_i32 = arith.constant 0 : i32
    %c0_i32_0 = arith.constant 0 : i32
    return %c0_i32, %arg0 : i32, i32
  }
  func.func @transform_11(%arg0: i32) -> (i32, i32) {
    %c0_i32 = arith.constant 0 : i32
    %c0_i32_0 = arith.constant 0 : i32
    return %c0_i32, %arg0 : i32, i32
  }
}

</mosaic_0001>

<llo_original>
// kernel: linear_masked_coupling_forward_fmajor.1
$region0: #{linear_masked_coupling_forward_fmajor.1}
  #allocation0 [shape = 'u32[]', space=smem, size = 0x4, offset = 0x4, fixed_abs, tag = 'smem constant byte address 0x4 - core index']
  #allocation1 [shape = 'u32[144,128]{1,0:T(1,128)}', space=vmem, size = 0x12000, scoped, tag = 'internal scratch']
  %s0 = inlined_call_operand.vmem [shape: f32[8,384], index: 0, kind: input, shape index: {}]
  %s1 = inlined_call_operand.vmem [shape: f32[8,1], index: 1, kind: input, shape index: {}]
  %s2 = inlined_call_operand.vmem [shape: bf16[64,8], index: 2, kind: input, shape index: {}]
  %s3 = inlined_call_operand.vmem [shape: bf16[64,64], index: 3, kind: input, shape index: {}]
  %s4 = inlined_call_operand.vmem [shape: bf16[64,64], index: 4, kind: input, shape index: {}]
  %s5 = inlined_call_operand.vmem [shape: bf16[16,64], index: 5, kind: input, shape index: {}]
  %s6 = inlined_call_operand.vmem [shape: f32[64,1], index: 6, kind: input, shape index: {}]
  %s7 = inlined_call_operand.vmem [shape: f32[64,1], index: 7, kind: input, shape index: {}]
  %s8 = inlined_call_operand.vmem [shape: f32[64,1], index: 8, kind: input, shape index: {}]
  %s9 = inlined_call_operand.vmem [shape: f32[16,1], index: 9, kind: input, shape index: {}]
  %s10 = inlined_call_operand.hbm [shape: f32[8,384], index: 10, kind: output, shape index: {0}]
  %s11 = inlined_call_operand.hbm [shape: f32[8,384], index: 11, kind: output, shape index: {1}]
  %12 = xla_tuple %s10, %s11
  %s13 = sld [smem:[#allocation0]]
  $region58: #{linear_masked_coupling_forward_fmajor.1} parent=0
    _
  %s15 = ssub.s32 1, %s13
  %s16 = scalar_select 0, %s15, %s13
  $region1: #{linear_masked_coupling_forward_fmajor.1} parent=0
    #allocation2 [shape = 'u8[12288]{0}', space=vmem, size = 0x3000, scoped, tag = 'output window, operand 0, single buffered']
    #allocation3 [shape = 's32[1]{0}', space=sflag, size = 0x4, scoped, tag = 'scoped memory for linear_masked_coupling_forward_fmajor.1']
    #allocation4 [shape = 'u8[12288]{0}', space=vmem, size = 0x3000, scoped, tag = 'output window, operand 1, single buffered']
    #allocation5 [shape = 's32[1]{0}', space=sflag, size = 0x4, scoped, tag = 'scoped memory for linear_masked_coupling_forward_fmajor.1']
    %17 = vsyncpa [#allocation3], 0
    %18 = vsyncpa [#allocation5], 0
    // Predicated region
    $region2: #{linear_masked_coupling_forward_fmajor.1} parent=1 // pred_check
      _
    $region3: #{linear_masked_coupling_forward_fmajor.1} parent=1 // pred_check_branch
      %20 = sbr.rel (0) target = $region5
    $region4: #{linear_masked_coupling_forward_fmajor.1} parent=1 // pred_region
      _
    $region5: #{linear_masked_coupling_forward_fmajor.1} parent=1 // pred_fallthru
      _
    // Predicated region
    $region6: #{linear_masked_coupling_forward_fmajor.1} parent=1 // pred_check
      _
    $region7: #{linear_masked_coupling_forward_fmajor.1} parent=1 // pred_check_branch
      %22 = sbr.rel (0) target = $region9
    $region8: #{linear_masked_coupling_forward_fmajor.1} parent=1 // pred_region
      _
    $region9: #{linear_masked_coupling_forward_fmajor.1} parent=1 // pred_fallthru
      _
    // Predicated region
    $region10: #{linear_masked_coupling_forward_fmajor.1} parent=1 // pred_check
      _
    $region11: #{linear_masked_coupling_forward_fmajor.1} parent=1 // pred_check_branch
      %24 = sbr.rel (0) target = $region13
    $region12: #{linear_masked_coupling_forward_fmajor.1} parent=1 // pred_region
      _
    $region13: #{linear_masked_coupling_forward_fmajor.1} parent=1 // pred_fallthru
      _
    // Predicated region
    $region14: #{linear_masked_coupling_forward_fmajor.1} parent=1 // pred_check
      _
    $region15: #{linear_masked_coupling_forward_fmajor.1} parent=1 // pred_check_branch
      %26 = sbr.rel (0) target = $region17
    $region16: #{linear_masked_coupling_forward_fmajor.1} parent=1 // pred_region
      _
    $region17: #{linear_masked_coupling_forward_fmajor.1} parent=1 // pred_fallthru
      _
    // Predicated region
    $region18: #{linear_masked_coupling_forward_fmajor.1} parent=1 // pred_check
      _
    $region19: #{linear_masked_coupling_forward_fmajor.1} parent=1 // pred_check_branch
      %28 = sbr.rel (0) target = $region21
    $region20: #{linear_masked_coupling_forward_fmajor.1} parent=1 // pred_region
      _
    $region21: #{linear_masked_coupling_forward_fmajor.1} parent=1 // pred_fallthru
      _
    // Predicated region
    $region22: #{linear_masked_coupling_forward_fmajor.1} parent=1 // pred_check
      _
    $region23: #{linear_masked_coupling_forward_fmajor.1} parent=1 // pred_check_branch
      %30 = sbr.rel (0) target = $region25
    $region24: #{linear_masked_coupling_forward_fmajor.1} parent=1 // pred_region
      _
    $region25: #{linear_masked_coupling_forward_fmajor.1} parent=1 // pred_fallthru
      _
    // Predicated region
    $region26: #{linear_masked_coupling_forward_fmajor.1} parent=1 // pred_check
      _
    $region27: #{linear_masked_coupling_forward_fmajor.1} parent=1 // pred_check_branch
      %32 = sbr.rel (0) target = $region29
    $region28: #{linear_masked_coupling_forward_fmajor.1} parent=1 // pred_region
      _
    $region29: #{linear_masked_coupling_forward_fmajor.1} parent=1 // pred_fallthru
      _
    // Predicated region
    $region30: #{linear_masked_coupling_forward_fmajor.1} parent=1 // pred_check
      _
    $region31: #{linear_masked_coupling_forward_fmajor.1} parent=1 // pred_check_branch
      %34 = sbr.rel (0) target = $region33
    $region32: #{linear_masked_coupling_forward_fmajor.1} parent=1 // pred_region
      _
    $region33: #{linear_masked_coupling_forward_fmajor.1} parent=1 // pred_fallthru
      _
    // Predicated region
    $region34: #{linear_masked_coupling_forward_fmajor.1} parent=1 // pred_check
      _
    $region35: #{linear_masked_coupling_forward_fmajor.1} parent=1 // pred_check_branch
      %36 = sbr.rel (0) target = $region37
    $region36: #{linear_masked_coupling_forward_fmajor.1} parent=1 // pred_region
      _
    $region37: #{linear_masked_coupling_forward_fmajor.1} parent=1 // pred_fallthru
      _
    // Predicated region
    $region38: #{linear_masked_coupling_forward_fmajor.1} parent=1 // pred_check
      _
    $region39: #{linear_masked_coupling_forward_fmajor.1} parent=1 // pred_check_branch
      %38 = sbr.rel (0) target = $region41
    $region40: #{linear_masked_coupling_forward_fmajor.1} parent=1 // pred_region
      _
    $region41: #{linear_masked_coupling_forward_fmajor.1} parent=1 // pred_fallthru
      _
    %v40 = vld [vmem:[%s0] sm:$0xff]
    %v41 = vld [vmem:[%s0 + $0x8] sm:$0xff]
    %v42 = vld [vmem:[%s0 + $0x10] sm:$0xff]
    %v43 = vld [vmem:[%s1] sm:$0xff]
    %v44 = vsub.f32 1.0, %v43
    %46 = vset.pattern.permute.xlu0 0
    %47 = vperm.xlu0 %46, %v43
    %v48 = vpop.permute.xlu0 %47
    %v50 = vmul.f32 %v40, %v48
    %v51 = vmul.f32 %v41, %v48
    %v52 = vmul.f32 %v42, %v48
    %v53 = vld [vmem:[%s2] sm:$0xf]
    %v54 = vld [vmem:[%s2 + $0x4] sm:$0xf]
    %v55 = vld [vmem:[%s2 + $0x8] sm:$0xf]
    %v56 = vld [vmem:[%s2 + $0xc] sm:$0xf]
    %v57 = vld [vmem:[%s2 + $0x10] sm:$0xf]
    %v58 = vld [vmem:[%s2 + $0x14] sm:$0xf]
    %v59 = vld [vmem:[%s2 + $0x18] sm:$0xf]
    %v60 = vld [vmem:[%s2 + $0x1c] sm:$0xf]
    %v61 = vld [vmem:[%s6] sm:$0xff]
    %v62 = vld [vmem:[%s6 + $0x8] sm:$0xff]
    %v63 = vld [vmem:[%s6 + $0x10] sm:$0xff]
    %v64 = vld [vmem:[%s6 + $0x18] sm:$0xff]
    %v65 = vld [vmem:[%s6 + $0x20] sm:$0xff]
    %v66 = vld [vmem:[%s6 + $0x28] sm:$0xff]
    %v67 = vld [vmem:[%s6 + $0x30] sm:$0xff]
    %v68 = vld [vmem:[%s6 + $0x38] sm:$0xff]
    %v69 = vpack.c.bf16 %v50, %v50
    %v70 = vpack.c.bf16 %v51, %v51
    %v71 = vpack.c.bf16 %v52, %v52
    %73 = vset.pattern.permute.xlu0 0
    %74 = vperm.xlu0 %73, %v61
    %v75 = vpop.permute.xlu0 %74
    %78 = vset.pattern.permute.xlu0 0
    %79 = vperm.xlu0 %78, %v62
    %v80 = vpop.permute.xlu0 %79
    %83 = vset.pattern.permute.xlu0 0
    %84 = vperm.xlu0 %83, %v63
    %v85 = vpop.permute.xlu0 %84
    %88 = vset.pattern.permute.xlu0 0
    %89 = vperm.xlu0 %88, %v64
    %v90 = vpop.permute.xlu0 %89
    %93 = vset.pattern.permute.xlu0 0
    %94 = vperm.xlu0 %93, %v65
    %v95 = vpop.permute.xlu0 %94
    %98 = vset.pattern.permute.xlu0 0
    %99 = vperm.xlu0 %98, %v66
    %v100 = vpop.permute.xlu0 %99
    %103 = vset.pattern.permute.xlu0 0
    %104 = vperm.xlu0 %103, %v67
    %v105 = vpop.permute.xlu0 %104
    %108 = vset.pattern.permute.xlu0 0
    %109 = vperm.xlu0 %108, %v68
    %v110 = vpop.permute.xlu0 %109
    %v120 = vunpack.c.l.b16 %v53
    %v121 = vunpack.c.l.b16 %v54
    %v122 = vunpack.c.l.b16 %v55
    %v123 = vunpack.c.l.b16 %v56
    %v124 = vunpack.c.l.b16 %v57
    %v125 = vunpack.c.l.b16 %v58
    %v126 = vunpack.c.l.b16 %v59
    %v127 = vunpack.c.l.b16 %v60
    %v128 = vpack.c.b16 %v121, %v120
    %v129 = vpack.c.b16 %v123, %v122
    %v130 = vpack.c.b16 %v125, %v124
    %v131 = vpack.c.b16 %v127, %v126
    %vm132 = vcmask 64512
    %v134 = vsel %vm132, %v128, 0
    %v137 = vsel %vm132, %v129, 0
    %v140 = vsel %vm132, %v130, 0
    %v143 = vsel %vm132, %v131, 0
    %vm145 = vcmask 1043456
    %v147 = vsel %vm145, %v69, 0
    %v150 = vsel %vm145, %v70, 0
    %v153 = vsel %vm145, %v71, 0
    %155 = vmatprep.subr.bf16.mxu0 %v150
    %156 = vmatpush1.bf16.msra.mxu0 %v147
    %157 = vmatprep.subr.bf16.mxu0 0
    %158 = vmatpush1.bf16.msra.mxu0 0
    %159 = vmatprep.subr.bf16.mxu0 0
    %160 = vmatpush1.bf16.msra.mxu0 0
    %161 = vmatprep.subr.bf16.mxu0 0
    %162 = vmatpush1.bf16.msra.mxu0 0
    %163 = vmatprep.subr.bf16.mxu0 0
    %164 = vmatpush1.bf16.msra.mxu0 0
    %165 = vmatprep.subr.bf16.mxu0 0
    %166 = vmatpush1.bf16.msra.mxu0 0
    %167 = vmatprep.subr.bf16.mxu0 0
    %168 = vmatpush1.bf16.msra.mxu0 0
    %169 = vmatprep.subr.bf16.mxu0 0
    %170 = vmatpush1.bf16.msra.mxu0 0
    %171 = vmatprep.subr.bf16.mxu0 0
    %172 = vmatpush1.bf16.msra.mxu0 0
    %173 = vmatprep.subr.bf16.mxu0 0
    %174 = vmatpush1.bf16.msra.mxu0 0
    %175 = vmatprep.subr.bf16.mxu0 0
    %176 = vmatpush1.bf16.msra.mxu0 0
    %177 = vmatprep.subr.bf16.mxu0 0
    %178 = vmatpush1.bf16.msra.mxu0 0
    %179 = vmatprep.subr.bf16.mxu0 0
    %180 = vmatpush1.bf16.msra.mxu0 0
    %181 = vmatprep.subr.bf16.mxu0 0
    %182 = vmatpush1.bf16.msra.mxu0 0
    %183 = vmatprep.subr.bf16.mxu0 0
    %184 = vmatpush1.bf16.msra.mxu0 0
    %185 = vmatprep.subr.bf16.mxu0 0
    %186 = vmatpush1.bf16.msra.mxu0 0
    %187 = vmatprep.mubr.bf16.mxu0 0
    %188 = vmatmul.mubr.bf16.gmra.mrb[0].mxu0 %v134
    %v189 = vpop.f32.mrb[0].mxu0
    %v190 = vadd.f32 %v75, %v189
    %v191 = vpop.f32.mrb[0].mxu0
    %v192 = vadd.f32 %v75, %v191
    %v193 = vpop.f32.mrb[0].mxu0
    %v194 = vadd.f32 %v80, %v193
    %v195 = vpop.f32.mrb[0].mxu0
    %v196 = vadd.f32 %v80, %v195
    %197 = vmatprep.mubr.bf16.mxu0 0
    %198 = vmatmul.mubr.bf16.gmra.mrb[0].mxu0 %v137
    %v199 = vpop.f32.mrb[0].mxu0
    %v200 = vadd.f32 %v85, %v199
    %v201 = vpop.f32.mrb[0].mxu0
    %v202 = vadd.f32 %v85, %v201
    %v203 = vpop.f32.mrb[0].mxu0
    %v204 = vadd.f32 %v90, %v203
    %v205 = vpop.f32.mrb[0].mxu0
    %v206 = vadd.f32 %v90, %v205
    %207 = vmatprep.mubr.bf16.mxu0 0
    %208 = vmatmul.mubr.bf16.gmra.mrb[0].mxu0 %v140
    %v209 = vpop.f32.mrb[0].mxu0
    %v210 = vadd.f32 %v95, %v209
    %v211 = vpop.f32.mrb[0].mxu0
    %v212 = vadd.f32 %v95, %v211
    %v213 = vpop.f32.mrb[0].mxu0
    %v214 = vadd.f32 %v100, %v213
    %v215 = vpop.f32.mrb[0].mxu0
    %v216 = vadd.f32 %v100, %v215
    %217 = vmatprep.mubr.bf16.mxu0 0
    %218 = vmatmul.mubr.bf16.gmra.mrb[0].mxu0 %v143
    %v219 = vpop.f32.mrb[0].mxu0
    %v220 = vadd.f32 %v105, %v219
    %v221 = vpop.f32.mrb[0].mxu0
    %v222 = vadd.f32 %v105, %v221
    %v223 = vpop.f32.mrb[0].mxu0
    %v224 = vadd.f32 %v110, %v223
    %v225 = vpop.f32.mrb[0].mxu0
    %v226 = vadd.f32 %v110, %v225
    %227 = vdwg.mxu0
    %228 = vmatprep.subr.bf16.mxu0 0
    %229 = vmatpush1.bf16.msra.mxu0 %v153
    %230 = vmatprep.subr.bf16.mxu0 0
    %231 = vmatpush1.bf16.msra.mxu0 0
    %232 = vmatprep.subr.bf16.mxu0 0
    %233 = vmatpush1.bf16.msra.mxu0 0
    %234 = vmatprep.subr.bf16.mxu0 0
    %235 = vmatpush1.bf16.msra.mxu0 0
    %236 = vmatprep.subr.bf16.mxu0 0
    %237 = vmatpush1.bf16.msra.mxu0 0
    %238 = vmatprep.subr.bf16.mxu0 0
    %239 = vmatpush1.bf16.msra.mxu0 0
    %240 = vmatprep.subr.bf16.mxu0 0
    %241 = vmatpush1.bf16.msra.mxu0 0
    %242 = vmatprep.subr.bf16.mxu0 0
    %243 = vmatpush1.bf16.msra.mxu0 0
    %244 = vmatprep.subr.bf16.mxu0 0
    %245 = vmatpush1.bf16.msra.mxu0 0
    %246 = vmatprep.subr.bf16.mxu0 0
    %247 = vmatpush1.bf16.msra.mxu0 0
    %248 = vmatprep.subr.bf16.mxu0 0
    %249 = vmatpush1.bf16.msra.mxu0 0
    %250 = vmatprep.subr.bf16.mxu0 0
    %251 = vmatpush1.bf16.msra.mxu0 0
    %252 = vmatprep.subr.bf16.mxu0 0
    %253 = vmatpush1.bf16.msra.mxu0 0
    %254 = vmatprep.subr.bf16.mxu0 0
    %255 = vmatpush1.bf16.msra.mxu0 0
    %256 = vmatprep.subr.bf16.mxu0 0
    %257 = vmatpush1.bf16.msra.mxu0 0
    %258 = vmatprep.subr.bf16.mxu0 0
    %259 = vmatpush1.bf16.msra.mxu0 0
    %260 = vmatprep.mubr.bf16.mxu0 0
    %261 = vmatmul.mubr.bf16.gmra.mrb[0].mxu0 %v134
    %v262 = vpop.f32.mrb[0].mxu0
    %v263 = vadd.f32 %v75, %v262
    %v264 = vpop.f32.mrb[0].mxu0
    %v265 = vpop.f32.mrb[0].mxu0
    %v266 = vadd.f32 %v80, %v265
    %v267 = vpop.f32.mrb[0].mxu0
    %268 = vmatprep.mubr.bf16.mxu0 0
    %269 = vmatmul.mubr.bf16.gmra.mrb[0].mxu0 %v137
    %v270 = vpop.f32.mrb[0].mxu0
    %v271 = vadd.f32 %v85, %v270
    %v272 = vpop.f32.mrb[0].mxu0
    %v273 = vpop.f32.mrb[0].mxu0
    %v274 = vadd.f32 %v90, %v273
    %v275 = vpop.f32.mrb[0].mxu0
    %276 = vmatprep.mubr.bf16.mxu0 0
    %277 = vmatmul.mubr.bf16.gmra.mrb[0].mxu0 %v140
    %v278 = vpop.f32.mrb[0].mxu0
    %v279 = vadd.f32 %v95, %v278
    %v280 = vpop.f32.mrb[0].mxu0
    %v281 = vpop.f32.mrb[0].mxu0
    %v282 = vadd.f32 %v100, %v281
    %v283 = vpop.f32.mrb[0].mxu0
    %284 = vmatprep.mubr.bf16.mxu0 0
    %285 = vmatmul.mubr.bf16.gmra.mrb[0].mxu0 %v143
    %v286 = vpop.f32.mrb[0].mxu0
    %v287 = vadd.f32 %v105, %v286
    %v288 = vpop.f32.mrb[0].mxu0
    %v289 = vpop.f32.mrb[0].mxu0
    %v290 = vadd.f32 %v110, %v289
    %v291 = vpop.f32.mrb[0].mxu0
    %292 = vdwg.mxu0
    %v293 = vtanh.pop %v190
    %v294 = vtanh.pop %v192
    %v295 = vtanh.pop %v263
    %v296 = vtanh.pop %v194
    %v297 = vtanh.pop %v196
    %v298 = vtanh.pop %v266
    %v299 = vtanh.pop %v200
    %v300 = vtanh.pop %v202
    %v301 = vtanh.pop %v271
    %v302 = vtanh.pop %v204
    %v303 = vtanh.pop %v206
    %v304 = vtanh.pop %v274
    %v305 = vmax.f32 %v210, 0.0
    %v306 = vmax.f32 %v212, 0.0
    %v307 = vmax.f32 %v279, 0.0
    %v308 = vmax.f32 %v214, 0.0
    %v309 = vmax.f32 %v216, 0.0
    %v310 = vmax.f32 %v282, 0.0
    %v311 = vmax.f32 %v220, 0.0
    %v312 = vmax.f32 %v222, 0.0
    %v313 = vmax.f32 %v287, 0.0
    %v314 = vmax.f32 %v224, 0.0
    %v315 = vmax.f32 %v226, 0.0
    %v316 = vmax.f32 %v290, 0.0
    %v317 = vld [vmem:[%s3] sm:$0xf]
    %v318 = vld [vmem:[%s3 + $0x4] sm:$0xf]
    %v319 = vld [vmem:[%s3 + $0x8] sm:$0xf]
    %v320 = vld [vmem:[%s3 + $0xc] sm:$0xf]
    %v321 = vld [vmem:[%s3 + $0x10] sm:$0xf]
    %v322 = vld [vmem:[%s3 + $0x14] sm:$0xf]
    %v323 = vld [vmem:[%s3 + $0x18] sm:$0xf]
    %v324 = vld [vmem:[%s3 + $0x1c] sm:$0xf]
    %v325 = vld [vmem:[%s7] sm:$0xff]
    %v326 = vld [vmem:[%s7 + $0x8] sm:$0xff]
    %v327 = vld [vmem:[%s7 + $0x10] sm:$0xff]
    %v328 = vld [vmem:[%s7 + $0x18] sm:$0xff]
    %v329 = vld [vmem:[%s7 + $0x20] sm:$0xff]
    %v330 = vld [vmem:[%s7 + $0x28] sm:$0xff]
    %v331 = vld [vmem:[%s7 + $0x30] sm:$0xff]
    %v332 = vld [vmem:[%s7 + $0x38] sm:$0xff]
    %v333 = vpack.c.bf16 %v296, %v293
    %v334 = vpack.c.bf16 %v297, %v294
    %v335 = vpack.c.bf16 %v298, %v295
    %v336 = vpack.c.bf16 %v302, %v299
    %v337 = vpack.c.bf16 %v303, %v300
    %v338 = vpack.c.bf16 %v304, %v301
    %v339 = vpack.c.bf16 %v308, %v305
    %v340 = vpack.c.bf16 %v309, %v306
    %v341 = vpack.c.bf16 %v310, %v307
    %v342 = vpack.c.bf16 %v314, %v311
    %v343 = vpack.c.bf16 %v315, %v312
    %v344 = vpack.c.bf16 %v316, %v313
    %346 = vset.pattern.permute.xlu0 0
    %347 = vperm.xlu0 %346, %v325
    %v348 = vpop.permute.xlu0 %347
    %351 = vset.pattern.permute.xlu0 0
    %352 = vperm.xlu0 %351, %v326
    %v353 = vpop.permute.xlu0 %352
    %356 = vset.pattern.permute.xlu0 0
    %357 = vperm.xlu0 %356, %v327
    %v358 = vpop.permute.xlu0 %357
    %361 = vset.pattern.permute.xlu0 0
    %362 = vperm.xlu0 %361, %v328
    %v363 = vpop.permute.xlu0 %362
    %366 = vset.pattern.permute.xlu0 0
    %367 = vperm.xlu0 %366, %v329
    %v368 = vpop.permute.xlu0 %367
    %371 = vset.pattern.permute.xlu0 0
    %372 = vperm.xlu0 %371, %v330
    %v373 = vpop.permute.xlu0 %372
    %376 = vset.pattern.permute.xlu0 0
    %377 = vperm.xlu0 %376, %v331
    %v378 = vpop.permute.xlu0 %377
    %381 = vset.pattern.permute.xlu0 0
    %382 = vperm.xlu0 %381, %v332
    %v383 = vpop.permute.xlu0 %382
    %v393 = vunpack.c.l.b16 %v317
    %v394 = vunpack.c.l.b16 %v318
    %v395 = vunpack.c.l.b16 %v319
    %v396 = vunpack.c.l.b16 %v320
    %v397 = vunpack.c.l.b16 %v321
    %v398 = vunpack.c.l.b16 %v322
    %v399 = vunpack.c.l.b16 %v323
    %v400 = vunpack.c.l.b16 %v324
    %v401 = vpack.c.b16 %v394, %v393
    %v402 = vpack.c.b16 %v396, %v395
    %v403 = vpack.c.b16 %v398, %v397
    %v404 = vpack.c.b16 %v400, %v399
    %vm405 = vcmask 523264
    %v407 = vsel %vm405, %v401, 0
    %v410 = vsel %vm405, %v402, 0
    %v413 = vsel %vm405, %v403, 0
    %v416 = vsel %vm405, %v404, 0
    %418 = vmatprep.subr.bf16.mxu0 %v334
    %419 = vmatpush1.bf16.msra.mxu0 %v333
    %420 = vmatprep.subr.bf16.mxu0 %v337
    %421 = vmatpush1.bf16.msra.mxu0 %v336
    %422 = vmatprep.subr.bf16.mxu0 %v340
    %423 = vmatpush1.bf16.msra.mxu0 %v339
    %424 = vmatprep.subr.bf16.mxu0 %v343
    %425 = vmatpush1.bf16.msra.mxu0 %v342
    %426 = vmatprep.subr.bf16.mxu0 0
    %427 = vmatpush1.bf16.msra.mxu0 0
    %428 = vmatprep.subr.bf16.mxu0 0
    %429 = vmatpush1.bf16.msra.mxu0 0
    %430 = vmatprep.subr.bf16.mxu0 0
    %431 = vmatpush1.bf16.msra.mxu0 0
    %432 = vmatprep.subr.bf16.mxu0 0
    %433 = vmatpush1.bf16.msra.mxu0 0
    %434 = vmatprep.subr.bf16.mxu0 0
    %435 = vmatpush1.bf16.msra.mxu0 0
    %436 = vmatprep.subr.bf16.mxu0 0
    %437 = vmatpush1.bf16.msra.mxu0 0
    %438 = vmatprep.subr.bf16.mxu0 0
    %439 = vmatpush1.bf16.msra.mxu0 0
    %440 = vmatprep.subr.bf16.mxu0 0
    %441 = vmatpush1.bf16.msra.mxu0 0
    %442 = vmatprep.subr.bf16.mxu0 0
    %443 = vmatpush1.bf16.msra.mxu0 0
    %444 = vmatprep.subr.bf16.mxu0 0
    %445 = vmatpush1.bf16.msra.mxu0 0
    %446 = vmatprep.subr.bf16.mxu0 0
    %447 = vmatpush1.bf16.msra.mxu0 0
    %448 = vmatprep.subr.bf16.mxu0 0
    %449 = vmatpush1.bf16.msra.mxu0 0
    %450 = vmatprep.mubr.bf16.mxu0 0
    %451 = vmatmul.mubr.bf16.gmra.mrb[0].mxu0 %v407
    %v452 = vpop.f32.mrb[0].mxu0
    %v453 = vadd.f32 %v348, %v452
    %v454 = vpop.f32.mrb[0].mxu0
    %v455 = vadd.f32 %v348, %v454
    %v456 = vpop.f32.mrb[0].mxu0
    %v457 = vadd.f32 %v353, %v456
    %v458 = vpop.f32.mrb[0].mxu0
    %v459 = vadd.f32 %v353, %v458
    %460 = vmatprep.mubr.bf16.mxu0 0
    %461 = vmatmul.mubr.bf16.gmra.mrb[0].mxu0 %v410
    %v462 = vpop.f32.mrb[0].mxu0
    %v463 = vadd.f32 %v358, %v462
    %v464 = vpop.f32.mrb[0].mxu0
    %v465 = vadd.f32 %v358, %v464
    %v466 = vpop.f32.mrb[0].mxu0
    %v467 = vadd.f32 %v363, %v466
    %v468 = vpop.f32.mrb[0].mxu0
    %v469 = vadd.f32 %v363, %v468
    %470 = vmatprep.mubr.bf16.mxu0 0
    %471 = vmatmul.mubr.bf16.gmra.mrb[0].mxu0 %v413
    %v472 = vpop.f32.mrb[0].mxu0
    %v473 = vadd.f32 %v368, %v472
    %v474 = vpop.f32.mrb[0].mxu0
    %v475 = vadd.f32 %v368, %v474
    %v476 = vpop.f32.mrb[0].mxu0
    %v477 = vadd.f32 %v373, %v476
    %v478 = vpop.f32.mrb[0].mxu0
    %v479 = vadd.f32 %v373, %v478
    %480 = vmatprep.mubr.bf16.mxu0 0
    %481 = vmatmul.mubr.bf16.gmra.mrb[0].mxu0 %v416
    %v482 = vpop.f32.mrb[0].mxu0
    %v483 = vadd.f32 %v378, %v482
    %v484 = vpop.f32.mrb[0].mxu0
    %v485 = vadd.f32 %v378, %v484
    %v486 = vpop.f32.mrb[0].mxu0
    %v487 = vadd.f32 %v383, %v486
    %v488 = vpop.f32.mrb[0].mxu0
    %v489 = vadd.f32 %v383, %v488
    %490 = vdwg.mxu0
    %491 = vmatprep.subr.bf16.mxu0 0
    %492 = vmatpush1.bf16.msra.mxu0 %v335
    %493 = vmatprep.subr.bf16.mxu0 0
    %494 = vmatpush1.bf16.msra.mxu0 %v338
    %495 = vmatprep.subr.bf16.mxu0 0
    %496 = vmatpush1.bf16.msra.mxu0 %v341
    %497 = vmatprep.subr.bf16.mxu0 0
    %498 = vmatpush1.bf16.msra.mxu0 %v344
    %499 = vmatprep.subr.bf16.mxu0 0
    %500 = vmatpush1.bf16.msra.mxu0 0
    %501 = vmatprep.subr.bf16.mxu0 0
    %502 = vmatpush1.bf16.msra.mxu0 0
    %503 = vmatprep.subr.bf16.mxu0 0
    %504 = vmatpush1.bf16.msra.mxu0 0
    %505 = vmatprep.subr.bf16.mxu0 0
    %506 = vmatpush1.bf16.msra.mxu0 0
    %507 = vmatprep.subr.bf16.mxu0 0
    %508 = vmatpush1.bf16.msra.mxu0 0
    %509 = vmatprep.subr.bf16.mxu0 0
    %510 = vmatpush1.bf16.msra.mxu0 0
    %511 = vmatprep.subr.bf16.mxu0 0
    %512 = vmatpush1.bf16.msra.mxu0 0
    %513 = vmatprep.subr.bf16.mxu0 0
    %514 = vmatpush1.bf16.msra.mxu0 0
    %515 = vmatprep.subr.bf16.mxu0 0
    %516 = vmatpush1.bf16.msra.mxu0 0
    %517 = vmatprep.subr.bf16.mxu0 0
    %518 = vmatpush1.bf16.msra.mxu0 0
    %519 = vmatprep.subr.bf16.mxu0 0
    %520 = vmatpush1.bf16.msra.mxu0 0
    %521 = vmatprep.subr.bf16.mxu0 0
    %522 = vmatpush1.bf16.msra.mxu0 0
    %523 = vmatprep.mubr.bf16.mxu0 0
    %524 = vmatmul.mubr.bf16.gmra.mrb[0].mxu0 %v407
    %v525 = vpop.f32.mrb[0].mxu0
    %v526 = vadd.f32 %v348, %v525
    %v527 = vpop.f32.mrb[0].mxu0
    %v528 = vpop.f32.mrb[0].mxu0
    %v529 = vadd.f32 %v353, %v528
    %v530 = vpop.f32.mrb[0].mxu0
    %531 = vmatprep.mubr.bf16.mxu0 0
    %532 = vmatmul.mubr.bf16.gmra.mrb[0].mxu0 %v410
    %v533 = vpop.f32.mrb[0].mxu0
    %v534 = vadd.f32 %v358, %v533
    %v535 = vpop.f32.mrb[0].mxu0
    %v536 = vpop.f32.mrb[0].mxu0
    %v537 = vadd.f32 %v363, %v536
    %v538 = vpop.f32.mrb[0].mxu0
    %539 = vmatprep.mubr.bf16.mxu0 0
    %540 = vmatmul.mubr.bf16.gmra.mrb[0].mxu0 %v413
    %v541 = vpop.f32.mrb[0].mxu0
    %v542 = vadd.f32 %v368, %v541
    %v543 = vpop.f32.mrb[0].mxu0
    %v544 = vpop.f32.mrb[0].mxu0
    %v545 = vadd.f32 %v373, %v544
    %v546 = vpop.f32.mrb[0].mxu0
    %547 = vmatprep.mubr.bf16.mxu0 0
    %548 = vmatmul.mubr.bf16.gmra.mrb[0].mxu0 %v416
    %v549 = vpop.f32.mrb[0].mxu0
    %v550 = vadd.f32 %v378, %v549
    %v551 = vpop.f32.mrb[0].mxu0
    %v552 = vpop.f32.mrb[0].mxu0
    %v553 = vadd.f32 %v383, %v552
    %v554 = vpop.f32.mrb[0].mxu0
    %555 = vdwg.mxu0
    %v556 = vtanh.pop %v453
    %v557 = vtanh.pop %v455
    %v558 = vtanh.pop %v526
    %v559 = vtanh.pop %v457
    %v560 = vtanh.pop %v459
    %v561 = vtanh.pop %v529
    %v562 = vtanh.pop %v463
    %v563 = vtanh.pop %v465
    %v564 = vtanh.pop %v534
    %v565 = vtanh.pop %v467
    %v566 = vtanh.pop %v469
    %v567 = vtanh.pop %v537
    %v568 = vmax.f32 %v473, 0.0
    %v569 = vmax.f32 %v475, 0.0
    %v570 = vmax.f32 %v542, 0.0
    %v571 = vmax.f32 %v477, 0.0
    %v572 = vmax.f32 %v479, 0.0
    %v573 = vmax.f32 %v545, 0.0
    %v574 = vmax.f32 %v483, 0.0
    %v575 = vmax.f32 %v485, 0.0
    %v576 = vmax.f32 %v550, 0.0
    %v577 = vmax.f32 %v487, 0.0
    %v578 = vmax.f32 %v489, 0.0
    %v579 = vmax.f32 %v553, 0.0
    %v580 = vld [vmem:[%s4] sm:$0xf]
    %v581 = vld [vmem:[%s4 + $0x4] sm:$0xf]
    %v582 = vld [vmem:[%s4 + $0x8] sm:$0xf]
    %v583 = vld [vmem:[%s4 + $0xc] sm:$0xf]
    %v584 = vld [vmem:[%s4 + $0x10] sm:$0xf]
    %v585 = vld [vmem:[%s4 + $0x14] sm:$0xf]
    %v586 = vld [vmem:[%s4 + $0x18] sm:$0xf]
    %v587 = vld [vmem:[%s4 + $0x1c] sm:$0xf]
    %v588 = vld [vmem:[%s8] sm:$0xff]
    %v589 = vld [vmem:[%s8 + $0x8] sm:$0xff]
    %v590 = vld [vmem:[%s8 + $0x10] sm:$0xff]
    %v591 = vld [vmem:[%s8 + $0x18] sm:$0xff]
    %v592 = vld [vmem:[%s8 + $0x20] sm:$0xff]
    %v593 = vld [vmem:[%s8 + $0x28] sm:$0xff]
    %v594 = vld [vmem:[%s8 + $0x30] sm:$0xff]
    %v595 = vld [vmem:[%s8 + $0x38] sm:$0xff]
    %v596 = vpack.c.bf16 %v559, %v556
    %v597 = vpack.c.bf16 %v560, %v557
    %v598 = vpack.c.bf16 %v561, %v558
    %v599 = vpack.c.bf16 %v565, %v562
    %v600 = vpack.c.bf16 %v566, %v563
    %v601 = vpack.c.bf16 %v567, %v564
    %v602 = vpack.c.bf16 %v571, %v568
    %v603 = vpack.c.bf16 %v572, %v569
    %v604 = vpack.c.bf16 %v573, %v570
    %v605 = vpack.c.bf16 %v577, %v574
    %v606 = vpack.c.bf16 %v578, %v575
    %v607 = vpack.c.bf16 %v579, %v576
    %609 = vset.pattern.permute.xlu0 0
    %610 = vperm.xlu0 %609, %v588
    %v611 = vpop.permute.xlu0 %610
    %614 = vset.pattern.permute.xlu0 0
    %615 = vperm.xlu0 %614, %v589
    %v616 = vpop.permute.xlu0 %615
    %619 = vset.pattern.permute.xlu0 0
    %620 = vperm.xlu0 %619, %v590
    %v621 = vpop.permute.xlu0 %620
    %624 = vset.pattern.permute.xlu0 0
    %625 = vperm.xlu0 %624, %v591
    %v626 = vpop.permute.xlu0 %625
    %629 = vset.pattern.permute.xlu0 0
    %630 = vperm.xlu0 %629, %v592
    %v631 = vpop.permute.xlu0 %630
    %634 = vset.pattern.permute.xlu0 0
    %635 = vperm.xlu0 %634, %v593
    %v636 = vpop.permute.xlu0 %635
    %639 = vset.pattern.permute.xlu0 0
    %640 = vperm.xlu0 %639, %v594
    %v641 = vpop.permute.xlu0 %640
    %644 = vset.pattern.permute.xlu0 0
    %645 = vperm.xlu0 %644, %v595
    %v646 = vpop.permute.xlu0 %645
    %v656 = vunpack.c.l.b16 %v580
    %v657 = vunpack.c.l.b16 %v581
    %v658 = vunpack.c.l.b16 %v582
    %v659 = vunpack.c.l.b16 %v583
    %v660 = vunpack.c.l.b16 %v584
    %v661 = vunpack.c.l.b16 %v585
    %v662 = vunpack.c.l.b16 %v586
    %v663 = vunpack.c.l.b16 %v587
    %v664 = vpack.c.b16 %v657, %v656
    %v665 = vpack.c.b16 %v659, %v658
    %v666 = vpack.c.b16 %v661, %v660
    %v667 = vpack.c.b16 %v663, %v662
    %v669 = vsel %vm405, %v664, 0
    %v672 = vsel %vm405, %v665, 0
    %v675 = vsel %vm405, %v666, 0
    %v678 = vsel %vm405, %v667, 0
    %680 = vmatprep.subr.bf16.mxu0 %v597
    %681 = vmatpush1.bf16.msra.mxu0 %v596
    %682 = vmatprep.subr.bf16.mxu0 %v600
    %683 = vmatpush1.bf16.msra.mxu0 %v599
    %684 = vmatprep.subr.bf16.mxu0 %v603
    %685 = vmatpush1.bf16.msra.mxu0 %v602
    %686 = vmatprep.subr.bf16.mxu0 %v606
    %687 = vmatpush1.bf16.msra.mxu0 %v605
    %688 = vmatprep.subr.bf16.mxu0 0
    %689 = vmatpush1.bf16.msra.mxu0 0
    %690 = vmatprep.subr.bf16.mxu0 0
    %691 = vmatpush1.bf16.msra.mxu0 0
    %692 = vmatprep.subr.bf16.mxu0 0
    %693 = vmatpush1.bf16.msra.mxu0 0
    %694 = vmatprep.subr.bf16.mxu0 0
    %695 = vmatpush1.bf16.msra.mxu0 0
    %696 = vmatprep.subr.bf16.mxu0 0
    %697 = vmatpush1.bf16.msra.mxu0 0
    %698 = vmatprep.subr.bf16.mxu0 0
    %699 = vmatpush1.bf16.msra.mxu0 0
    %700 = vmatprep.subr.bf16.mxu0 0
    %701 = vmatpush1.bf16.msra.mxu0 0
    %702 = vmatprep.subr.bf16.mxu0 0
    %703 = vmatpush1.bf16.msra.mxu0 0
    %704 = vmatprep.subr.bf16.mxu0 0
    %705 = vmatpush1.bf16.msra.mxu0 0
    %706 = vmatprep.subr.bf16.mxu0 0
    %707 = vmatpush1.bf16.msra.mxu0 0
    %708 = vmatprep.subr.bf16.mxu0 0
    %709 = vmatpush1.bf16.msra.mxu0 0
    %710 = vmatprep.subr.bf16.mxu0 0
    %711 = vmatpush1.bf16.msra.mxu0 0
    %712 = vmatprep.mubr.bf16.mxu0 0
    %713 = vmatmul.mubr.bf16.gmra.mrb[0].mxu0 %v669
    %v714 = vpop.f32.mrb[0].mxu0
    %v715 = vadd.f32 %v611, %v714
    %v716 = vpop.f32.mrb[0].mxu0
    %v717 = vadd.f32 %v611, %v716
    %v718 = vpop.f32.mrb[0].mxu0
    %v719 = vadd.f32 %v616, %v718
    %v720 = vpop.f32.mrb[0].mxu0
    %v721 = vadd.f32 %v616, %v720
    %722 = vmatprep.mubr.bf16.mxu0 0
    %723 = vmatmul.mubr.bf16.gmra.mrb[0].mxu0 %v672
    %v724 = vpop.f32.mrb[0].mxu0
    %v725 = vadd.f32 %v621, %v724
    %v726 = vpop.f32.mrb[0].mxu0
    %v727 = vadd.f32 %v621, %v726
    %v728 = vpop.f32.mrb[0].mxu0
    %v729 = vadd.f32 %v626, %v728
    %v730 = vpop.f32.mrb[0].mxu0
    %v731 = vadd.f32 %v626, %v730
    %732 = vmatprep.mubr.bf16.mxu0 0
    %733 = vmatmul.mubr.bf16.gmra.mrb[0].mxu0 %v675
    %v734 = vpop.f32.mrb[0].mxu0
    %v735 = vadd.f32 %v631, %v734
    %v736 = vpop.f32.mrb[0].mxu0
    %v737 = vadd.f32 %v631, %v736
    %v738 = vpop.f32.mrb[0].mxu0
    %v739 = vadd.f32 %v636, %v738
    %v740 = vpop.f32.mrb[0].mxu0
    %v741 = vadd.f32 %v636, %v740
    %742 = vmatprep.mubr.bf16.mxu0 0
    %743 = vmatmul.mubr.bf16.gmra.mrb[0].mxu0 %v678
    %v744 = vpop.f32.mrb[0].mxu0
    %v745 = vadd.f32 %v641, %v744
    %v746 = vpop.f32.mrb[0].mxu0
    %v747 = vadd.f32 %v641, %v746
    %v748 = vpop.f32.mrb[0].mxu0
    %v749 = vadd.f32 %v646, %v748
    %v750 = vpop.f32.mrb[0].mxu0
    %v751 = vadd.f32 %v646, %v750
    %752 = vdwg.mxu0
    %753 = vmatprep.subr.bf16.mxu0 0
    %754 = vmatpush1.bf16.msra.mxu0 %v598
    %755 = vmatprep.subr.bf16.mxu0 0
    %756 = vmatpush1.bf16.msra.mxu0 %v601
    %757 = vmatprep.subr.bf16.mxu0 0
    %758 = vmatpush1.bf16.msra.mxu0 %v604
    %759 = vmatprep.subr.bf16.mxu0 0
    %760 = vmatpush1.bf16.msra.mxu0 %v607
    %761 = vmatprep.subr.bf16.mxu0 0
    %762 = vmatpush1.bf16.msra.mxu0 0
    %763 = vmatprep.subr.bf16.mxu0 0
    %764 = vmatpush1.bf16.msra.mxu0 0
    %765 = vmatprep.subr.bf16.mxu0 0
    %766 = vmatpush1.bf16.msra.mxu0 0
    %767 = vmatprep.subr.bf16.mxu0 0
    %768 = vmatpush1.bf16.msra.mxu0 0
    %769 = vmatprep.subr.bf16.mxu0 0
    %770 = vmatpush1.bf16.msra.mxu0 0
    %771 = vmatprep.subr.bf16.mxu0 0
    %772 = vmatpush1.bf16.msra.mxu0 0
    %773 = vmatprep.subr.bf16.mxu0 0
    %774 = vmatpush1.bf16.msra.mxu0 0
    %775 = vmatprep.subr.bf16.mxu0 0
    %776 = vmatpush1.bf16.msra.mxu0 0
    %777 = vmatprep.subr.bf16.mxu0 0
    %778 = vmatpush1.bf16.msra.mxu0 0
    %779 = vmatprep.subr.bf16.mxu0 0
    %780 = vmatpush1.bf16.msra.mxu0 0
    %781 = vmatprep.subr.bf16.mxu0 0
    %782 = vmatpush1.bf16.msra.mxu0 0
    %783 = vmatprep.subr.bf16.mxu0 0
    %784 = vmatpush1.bf16.msra.mxu0 0
    %785 = vmatprep.mubr.bf16.mxu0 0
    %786 = vmatmul.mubr.bf16.gmra.mrb[0].mxu0 %v669
    %v787 = vpop.f32.mrb[0].mxu0
    %v788 = vadd.f32 %v611, %v787
    %v789 = vpop.f32.mrb[0].mxu0
    %v790 = vpop.f32.mrb[0].mxu0
    %v791 = vadd.f32 %v616, %v790
    %v792 = vpop.f32.mrb[0].mxu0
    %793 = vmatprep.mubr.bf16.mxu0 0
    %794 = vmatmul.mubr.bf16.gmra.mrb[0].mxu0 %v672
    %v795 = vpop.f32.mrb[0].mxu0
    %v796 = vadd.f32 %v621, %v795
    %v797 = vpop.f32.mrb[0].mxu0
    %v798 = vpop.f32.mrb[0].mxu0
    %v799 = vadd.f32 %v626, %v798
    %v800 = vpop.f32.mrb[0].mxu0
    %801 = vmatprep.mubr.bf16.mxu0 0
    %802 = vmatmul.mubr.bf16.gmra.mrb[0].mxu0 %v675
    %v803 = vpop.f32.mrb[0].mxu0
    %v804 = vadd.f32 %v631, %v803
    %v805 = vpop.f32.mrb[0].mxu0
    %v806 = vpop.f32.mrb[0].mxu0
    %v807 = vadd.f32 %v636, %v806
    %v808 = vpop.f32.mrb[0].mxu0
    %809 = vmatprep.mubr.bf16.mxu0 0
    %810 = vmatmul.mubr.bf16.gmra.mrb[0].mxu0 %v678
    %v811 = vpop.f32.mrb[0].mxu0
    %v812 = vadd.f32 %v641, %v811
    %v813 = vpop.f32.mrb[0].mxu0
    %v814 = vpop.f32.mrb[0].mxu0
    %v815 = vadd.f32 %v646, %v814
    %v816 = vpop.f32.mrb[0].mxu0
    %817 = vdwg.mxu0
    %v818 = vtanh.pop %v715
    %v819 = vtanh.pop %v717
    %v820 = vtanh.pop %v788
    %v821 = vtanh.pop %v719
    %v822 = vtanh.pop %v721
    %v823 = vtanh.pop %v791
    %v824 = vtanh.pop %v725
    %v825 = vtanh.pop %v727
    %v826 = vtanh.pop %v796
    %v827 = vtanh.pop %v729
    %v828 = vtanh.pop %v731
    %v829 = vtanh.pop %v799
    %v830 = vmax.f32 %v735, 0.0
    %v831 = vmax.f32 %v737, 0.0
    %v832 = vmax.f32 %v804, 0.0
    %v833 = vmax.f32 %v739, 0.0
    %v834 = vmax.f32 %v741, 0.0
    %v835 = vmax.f32 %v807, 0.0
    %v836 = vmax.f32 %v745, 0.0
    %v837 = vmax.f32 %v747, 0.0
    %v838 = vmax.f32 %v812, 0.0
    %v839 = vmax.f32 %v749, 0.0
    %v840 = vmax.f32 %v751, 0.0
    %v841 = vmax.f32 %v815, 0.0
    %v842 = vld [vmem:[%s5] sm:$0xf]
    %v843 = vld [vmem:[%s5 + $0x4] sm:$0xf]
    %v844 = vld [vmem:[%s9] sm:$0xff]
    %v845 = vld [vmem:[%s9 + $0x8] sm:$0xff]
    %v846 = vpack.c.bf16 %v821, %v818
    %v847 = vpack.c.bf16 %v822, %v819
    %v848 = vpack.c.bf16 %v823, %v820
    %v849 = vpack.c.bf16 %v827, %v824
    %v850 = vpack.c.bf16 %v828, %v825
    %v851 = vpack.c.bf16 %v829, %v826
    %v852 = vpack.c.bf16 %v833, %v830
    %v853 = vpack.c.bf16 %v834, %v831
    %v854 = vpack.c.bf16 %v835, %v832
    %v855 = vpack.c.bf16 %v839, %v836
    %v856 = vpack.c.bf16 %v840, %v837
    %v857 = vpack.c.bf16 %v841, %v838
    %859 = vset.pattern.permute.xlu0 0
    %860 = vperm.xlu0 %859, %v844
    %v861 = vpop.permute.xlu0 %860
    %864 = vset.pattern.permute.xlu0 0
    %865 = vperm.xlu0 %864, %v845
    %v866 = vpop.permute.xlu0 %865
    %v870 = vunpack.c.l.b16 %v842
    %v871 = vunpack.c.l.b16 %v843
    %v872 = vpack.c.b16 %v871, %v870
    %v874 = vsel %vm405, %v872, 0
    %876 = vmatprep.subr.bf16.mxu0 %v847
    %877 = vmatpush1.bf16.msra.mxu0 %v846
    %878 = vmatprep.subr.bf16.mxu0 %v850
    %879 = vmatpush1.bf16.msra.mxu0 %v849
    %880 = vmatprep.subr.bf16.mxu0 %v853
    %881 = vmatpush1.bf16.msra.mxu0 %v852
    %882 = vmatprep.subr.bf16.mxu0 %v856
    %883 = vmatpush1.bf16.msra.mxu0 %v855
    %884 = vmatprep.subr.bf16.mxu0 0
    %885 = vmatpush1.bf16.msra.mxu0 0
    %886 = vmatprep.subr.bf16.mxu0 0
    %887 = vmatpush1.bf16.msra.mxu0 0
    %888 = vmatprep.subr.bf16.mxu0 0
    %889 = vmatpush1.bf16.msra.mxu0 0
    %890 = vmatprep.subr.bf16.mxu0 0
    %891 = vmatpush1.bf16.msra.mxu0 0
    %892 = vmatprep.subr.bf16.mxu0 0
    %893 = vmatpush1.bf16.msra.mxu0 0
    %894 = vmatprep.subr.bf16.mxu0 0
    %895 = vmatpush1.bf16.msra.mxu0 0
    %896 = vmatprep.subr.bf16.mxu0 0
    %897 = vmatpush1.bf16.msra.mxu0 0
    %898 = vmatprep.subr.bf16.mxu0 0
    %899 = vmatpush1.bf16.msra.mxu0 0
    %900 = vmatprep.subr.bf16.mxu0 0
    %901 = vmatpush1.bf16.msra.mxu0 0
    %902 = vmatprep.subr.bf16.mxu0 0
    %903 = vmatpush1.bf16.msra.mxu0 0
    %904 = vmatprep.subr.bf16.mxu0 0
    %905 = vmatpush1.bf16.msra.mxu0 0
    %906 = vmatprep.subr.bf16.mxu0 0
    %907 = vmatpush1.bf16.msra.mxu0 0
    %908 = vmatprep.mubr.bf16.mxu0 0
    %909 = vmatmul.mubr.bf16.gmra.mrb[0].mxu0 %v874
    %v910 = vpop.f32.mrb[0].mxu0
    %v911 = vadd.f32 %v861, %v910
    %v912 = vpop.f32.mrb[0].mxu0
    %v913 = vadd.f32 %v861, %v912
    %v914 = vpop.f32.mrb[0].mxu0
    %v915 = vadd.f32 %v866, %v914
    %v916 = vpop.f32.mrb[0].mxu0
    %v917 = vadd.f32 %v866, %v916
    %918 = vdwg.mxu0
    %919 = vmatprep.subr.bf16.mxu0 0
    %920 = vmatpush1.bf16.msra.mxu0 %v848
    %921 = vmatprep.subr.bf16.mxu0 0
    %922 = vmatpush1.bf16.msra.mxu0 %v851
    %923 = vmatprep.subr.bf16.mxu0 0
    %924 = vmatpush1.bf16.msra.mxu0 %v854
    %925 = vmatprep.subr.bf16.mxu0 0
    %926 = vmatpush1.bf16.msra.mxu0 %v857
    %927 = vmatprep.subr.bf16.mxu0 0
    %928 = vmatpush1.bf16.msra.mxu0 0
    %929 = vmatprep.subr.bf16.mxu0 0
    %930 = vmatpush1.bf16.msra.mxu0 0
    %931 = vmatprep.subr.bf16.mxu0 0
    %932 = vmatpush1.bf16.msra.mxu0 0
    %933 = vmatprep.subr.bf16.mxu0 0
    %934 = vmatpush1.bf16.msra.mxu0 0
    %935 = vmatprep.subr.bf16.mxu0 0
    %936 = vmatpush1.bf16.msra.mxu0 0
    %937 = vmatprep.subr.bf16.mxu0 0
    %938 = vmatpush1.bf16.msra.mxu0 0
    %939 = vmatprep.subr.bf16.mxu0 0
    %940 = vmatpush1.bf16.msra.mxu0 0
    %941 = vmatprep.subr.bf16.mxu0 0
    %942 = vmatpush1.bf16.msra.mxu0 0
    %943 = vmatprep.subr.bf16.mxu0 0
    %944 = vmatpush1.bf16.msra.mxu0 0
    %945 = vmatprep.subr.bf16.mxu0 0
    %946 = vmatpush1.bf16.msra.mxu0 0
    %947 = vmatprep.subr.bf16.mxu0 0
    %948 = vmatpush1.bf16.msra.mxu0 0
    %949 = vmatprep.subr.bf16.mxu0 0
    %950 = vmatpush1.bf16.msra.mxu0 0
    %951 = vmatprep.mubr.bf16.mxu0 0
    %952 = vmatmul.mubr.bf16.gmra.mrb[0].mxu0 %v874
    %v953 = vpop.f32.mrb[0].mxu0
    %v954 = vadd.f32 %v861, %v953
    %v955 = vpop.f32.mrb[0].mxu0
    %v956 = vpop.f32.mrb[0].mxu0
    %v957 = vadd.f32 %v866, %v956
    %v958 = vpop.f32.mrb[0].mxu0
    %959 = vdwg.mxu0
    %961 = vset.pattern.permute.xlu0 0
    %962 = vperm.xlu0 %961, %v44
    %v963 = vpop.permute.xlu0 %962
    %v965 = vmul.f32 %v911, %v963
    %v966 = vmul.f32 %v913, %v963
    %v967 = vmul.f32 %v954, %v963
    %v968 = vmul.f32 %v915, %v963
    %v969 = vmul.f32 %v917, %v963
    %v970 = vmul.f32 %v957, %v963
    %v971 = vmul.f32 %v965, 1.442695
    %v972 = vpow.pop %v971
    %v973 = vmul.f32 %v966, 1.442695
    %v974 = vpow.pop %v973
    %v975 = vmul.f32 %v967, 1.442695
    %v976 = vpow.pop %v975
    %v977 = vmul.f32 %v40, %v972
    %v978 = vmul.f32 %v41, %v974
    %v979 = vmul.f32 %v42, %v976
    %v980 = vmul.f32 %v963, %v977
    %v981 = vmul.f32 %v963, %v978
    %v982 = vmul.f32 %v963, %v979
    %v983 = vadd.f32 %v50, %v980
    %v984 = vadd.f32 %v51, %v981
    %v985 = vadd.f32 %v52, %v982
    %v986 = vadd.f32 %v983, %v968
    %v987 = vadd.f32 %v984, %v969
    %v988 = vadd.f32 %v985, %v970
    %989 = vst [vmem:[#allocation2] sm:$0xff] %v986
    %990 = vst [vmem:[#allocation2 + $0x8] sm:$0xff] %v987
    %991 = vst [vmem:[#allocation2 + $0x10] sm:$0xff] %v988
    %992 = vst [vmem:[#allocation4] sm:$0xff] %v965
    %993 = vst [vmem:[#allocation4 + $0x8] sm:$0xff] %v966
    %994 = vst [vmem:[#allocation4 + $0x10] sm:$0xff] %v967
    // Predicated region
    $region42: #{linear_masked_coupling_forward_fmajor.1} parent=1 // pred_check
      _
    $region43: #{linear_masked_coupling_forward_fmajor.1} parent=1 // pred_check_branch
      %996 = sbr.rel (0) target = $region45
    $region44: #{linear_masked_coupling_forward_fmajor.1} parent=1 // pred_region
      %s998 = ssub.s32 384, 384
      %999 = vsyncadd [#allocation3], %s998
      %s1001 = sshll.u32 [#allocation2], 4
      %s1002 = int_to_ptr.vmem [resolvable:$true] %s1001
      %1004 = dma.vmem_to_hbm [thread:$0]  %s1002, 384, %s10, [#allocation3]
    $region45: #{linear_masked_coupling_forward_fmajor.1} parent=1 // pred_fallthru
      _
    // Predicated region
    $region46: #{linear_masked_coupling_forward_fmajor.1} parent=1 // pred_check
      _
    $region47: #{linear_masked_coupling_forward_fmajor.1} parent=1 // pred_check_branch
      %1006 = sbr.rel (0) target = $region49
    $region48: #{linear_masked_coupling_forward_fmajor.1} parent=1 // pred_region
      %s1008 = ssub.s32 384, 384
      %1009 = vsyncadd [#allocation5], %s1008
      %s1011 = sshll.u32 [#allocation4], 4
      %s1012 = int_to_ptr.vmem [resolvable:$true] %s1011
      %1014 = dma.vmem_to_hbm [thread:$0]  %s1012, 384, %s11, [#allocation5]
    $region49: #{linear_masked_coupling_forward_fmajor.1} parent=1 // pred_fallthru
      _
    // Predicated region
    $region50: #{linear_masked_coupling_forward_fmajor.1} parent=1 // pred_check
      _
    $region51: #{linear_masked_coupling_forward_fmajor.1} parent=1 // pred_check_branch
      %1016 = sbr.rel (0) target = $region53
    $region52: #{linear_masked_coupling_forward_fmajor.1} parent=1 // pred_region
      %1017 = dma.done [#allocation3], 384
    $region53: #{linear_masked_coupling_forward_fmajor.1} parent=1 // pred_fallthru
      _
    // Predicated region
    $region54: #{linear_masked_coupling_forward_fmajor.1} parent=1 // pred_check
      _
    $region55: #{linear_masked_coupling_forward_fmajor.1} parent=1 // pred_check_branch
      %1019 = sbr.rel (0) target = $region57
    $region56: #{linear_masked_coupling_forward_fmajor.1} parent=1 // pred_region
      %1020 = dma.done [#allocation5], 384
    $region57: #{linear_masked_coupling_forward_fmajor.1} parent=1 // pred_fallthru
      _
    %1021 = vsyncpa [#allocation3], 1
    %1022 = vsyncpa [#allocation5], 1

</llo_original>
